<compile_context>
chip_gen: v6e
topology: v6e:2x2x1
jax: 0.10.0
libtpu: 0.0.40
codegen_flags: <defaults>
</compile_context>

<pallas_src>
import jax
import jax.numpy as jnp
from jax.experimental import pallas as pl
from jax.experimental.pallas import tpu as pltpu


def _round_up(x, m):
    return (x + m - 1) // m * m


def gcn_kernel(feat_ref, w_ref, adj_ref, b_ref, a_ref, out_ref, h_ref):
    # feat_ref: (1, Np, Fin_p)  bf16   full padded features for batch b
    # w_ref:    (Fin_p, Fout_p) bf16   W^T, zero padded
    # adj_ref:  (1, TN, Np)     bf16   one row tile of the adjacency
    # b_ref:    (1, Fout_p)     f32    bias, zero padded
    # a_ref:    (1, 1)          f32    PReLU shared slope (SMEM)
    # out_ref:  (1, TN, Fout_p) f32
    # h_ref:    (Np, Fout_p)    bf16   VMEM scratch, resident across row tiles

    # h = feat @ W^T -- computed once per batch (first row tile), reused by all
    # subsequent row tiles of the same batch.
    @pl.when(pl.program_id(1) == 0)
    def _():
        h_ref[...] = jnp.dot(
            feat_ref[0], w_ref[...], preferred_element_type=jnp.float32
        ).astype(h_ref.dtype)

    # out_tile = adj_tile @ h   (bf16 operands, f32 MXU accumulation)
    acc = jnp.dot(adj_ref[0], h_ref[...], preferred_element_type=jnp.float32)

    # Fused epilogue: bias add + PReLU, single lane-dense store.
    a = a_ref[0, 0]
    out = acc + b_ref[...]
    out_ref[0] = jnp.where(out > 0, out, a * out).astype(out_ref.dtype)


def gcn_layer(feat, adj, weight, bias, prelu_a, *,
              row_tile=512, compute_dtype=jnp.bfloat16):
    """feat: (B, N, Fin), adj: (B, N, N), weight: (Fout, Fin), bias: (Fout,)."""
    B, N, Fin = feat.shape
    Fout = weight.shape[0]

    # Lane dims padded to 128 (dense stores, full MXU width); the row tile is a
    # multiple of 8 (sublane) and N is padded to a multiple of the tile.
    # TODO(synk): for very small N*B the grid-step overhead dominates; blocking
    # several batches per step would amortize it further.
    fin_p = _round_up(Fin, 128)
    fout_p = _round_up(Fout, 128)
    tn = row_tile if N >= row_tile else _round_up(N, 8)
    np_ = _round_up(N, tn)

    f32 = jnp.float32
    feat_p = jnp.zeros((B, np_, fin_p), compute_dtype)
    feat_p = feat_p.at[:, :N, :Fin].set(feat.astype(compute_dtype))
    adj_p = jnp.zeros((B, np_, np_), compute_dtype)
    adj_p = adj_p.at[:, :N, :N].set(adj.astype(compute_dtype))
    w_t = jnp.zeros((fin_p, fout_p), compute_dtype)
    w_t = w_t.at[:Fin, :Fout].set(weight.T.astype(compute_dtype))
    b_p = jnp.zeros((1, fout_p), f32).at[0, :Fout].set(bias.astype(f32))
    a2 = jnp.asarray(prelu_a, f32).reshape(1, 1)

    grid = (B, np_ // tn)

    out_p = pl.pallas_call(
        gcn_kernel,
        out_shape=jax.ShapeDtypeStruct((B, np_, fout_p), f32),
        grid_spec=pltpu.PrefetchScalarGridSpec(
            num_scalar_prefetch=0,
            grid=grid,
            in_specs=[
                pl.BlockSpec((1, np_, fin_p), lambda b, j: (b, 0, 0)),
                pl.BlockSpec((fin_p, fout_p), lambda b, j: (0, 0)),
                pl.BlockSpec((1, tn, np_), lambda b, j: (b, j, 0)),
                pl.BlockSpec((1, fout_p), lambda b, j: (0, 0)),
                pl.BlockSpec(memory_space=pltpu.MemorySpace.SMEM),
            ],
            out_specs=pl.BlockSpec((1, tn, fout_p), lambda b, j: (b, j, 0)),
            scratch_shapes=[pltpu.VMEM((np_, fout_p), compute_dtype)],
        ),
        compiler_params=pltpu.CompilerParams(
            # Batch axis can be sharded across TensorCores; the row-tile axis
            # reuses the h scratch computed at j == 0, so it stays arbitrary.
            dimension_semantics=("parallel", "arbitrary"),
            vmem_limit_bytes=48 * 1024 * 1024,
        ),
    )(feat_p, w_t, adj_p, b_p, a2)

    return out_p[:, :N, :Fout]


if __name__ == "__main__":
    # Small deterministic example
    B, N, IN_FT, OUT_FT = 2, 16, 32, 32

    key = jax.random.PRNGKey(0)
    k_feat, k_adj, k_w = jax.random.split(key, 3)

    feat = jax.random.normal(k_feat, (B, N, IN_FT), dtype=jnp.float32)
    adj = jax.random.uniform(k_adj, (B, N, N), dtype=jnp.float32)

    # Parameter init mirroring the module's __init__:
    #  - nn.Linear weight: xavier_uniform_ -> U(-b, b), b = sqrt(6/(fan_in+fan_out))
    #  - bias: zeros; PReLU: single slope, default 0.25
    bound = (6.0 / (IN_FT + OUT_FT)) ** 0.5
    weight = jax.random.uniform(k_w, (OUT_FT, IN_FT), dtype=jnp.float32,
                                minval=-bound, maxval=bound)
    bias = jnp.zeros((OUT_FT,), dtype=jnp.float32)
    prelu_a = 0.25

    out = gcn_layer(feat, adj, weight, bias, prelu_a)
    out = jax.block_until_ready(out)

    # Reference in plain JAX, mirroring the kernel's bf16-in / f32-accumulate flow.
    cd = jnp.bfloat16
    f_c = feat.astype(cd).astype(jnp.float32)
    a_c = adj.astype(cd).astype(jnp.float32)
    w_c = weight.astype(cd).astype(jnp.float32)
    hi = jax.lax.Precision.HIGHEST
    h_ref = jnp.einsum("bnf,of->bno", f_c, w_c, precision=hi)
    h_ref = h_ref.astype(cd).astype(jnp.float32)
    o_ref = jnp.einsum("bnm,bmo->bno", a_c, h_ref, precision=hi) + bias
    y_ref = jnp.where(o_ref > 0, o_ref, prelu_a * o_ref)
    assert jnp.allclose(out, y_ref, atol=1e-2, rtol=1e-2)

    print("KERNEL_OK")
</pallas_src>

<mosaic_0001>
module attributes {stable_mosaic.version = 11 : i64} {
  func.func @gcn_kernel(%arg0: i32, %arg1: i32, %arg2: memref<1x16x128xbf16, #tpu.memory_space<vmem>>, %arg3: memref<128x128xbf16, #tpu.memory_space<vmem>>, %arg4: memref<1x16x16xbf16, #tpu.memory_space<vmem>>, %arg5: memref<1x128xf32, #tpu.memory_space<vmem>>, %arg6: memref<1x1xf32, #tpu.memory_space<smem>>, %arg7: memref<1x16x128xf32, #tpu.memory_space<vmem>>, %arg8: memref<16x128xbf16, #tpu.memory_space<vmem>>) attributes {dimension_semantics = [#tpu.dimension_semantics<parallel>, #tpu.dimension_semantics<arbitrary>], iteration_bounds = array<i64: 2, 1>, scalar_prefetch = 0 : i64, scratch_operands = 1 : i64, tpu.core_type = #tpu.core_type<tc>, window_params = [{transform_indices = @transform_0, window_bounds = array<i64: 1, 16, 128>}, {pipeline_mode = #tpu.pipeline_mode<synchronous>, transform_indices = @transform_1, window_bounds = array<i64: 128, 128>}, {transform_indices = @transform_2, window_bounds = array<i64: 1, 16, 16>}, {pipeline_mode = #tpu.pipeline_mode<synchronous>, transform_indices = @transform_3, window_bounds = array<i64: 1, 128>}, {transform_indices = @transform_4, window_bounds = array<i64: 1, 1>}, {transform_indices = @transform_5, window_bounds = array<i64: 1, 16, 128>}]} {
    %c0_i32 = arith.constant 0 : i32
    %0 = arith.cmpi eq, %arg1, %c0_i32 : i32
    %1 = arith.extui %0 : i1 to i32
    %c0_i32_0 = arith.constant 0 : i32
    %2 = arith.cmpi ne, %1, %c0_i32_0 : i32
    scf.if %2 {
      %c0_13 = arith.constant 0 : index
      %c0_14 = arith.constant 0 : index
      %c0_15 = arith.constant 0 : index
      %19 = vector.load %arg2[%c0_13, %c0_14, %c0_15] : memref<1x16x128xbf16, #tpu.memory_space<vmem>>, vector<1x16x128xbf16>
      %20 = vector.shape_cast %19 : vector<1x16x128xbf16> to vector<16x128xbf16>
      %c0_16 = arith.constant 0 : index
      %c0_17 = arith.constant 0 : index
      %21 = vector.load %arg3[%c0_16, %c0_17] : memref<128x128xbf16, #tpu.memory_space<vmem>>, vector<128x128xbf16>
      %cst_18 = arith.constant dense<0.000000e+00> : vector<16x128xf32>
      %22 = tpu.matmul %20, %21, %cst_18 {dimension_numbers = #tpu.dot_dimension_numbers<[1], [0], [0], [1], [0, 0, 1, 1], [], []>} : vector<16x128xbf16>, vector<128x128xbf16>, vector<16x128xf32> -> vector<16x128xf32>
      %23 = arith.truncf %22 : vector<16x128xf32> to vector<16x128xbf16>
      %c0_19 = arith.constant 0 : index
      %c0_20 = arith.constant 0 : index
      %24 = vector.load %arg8[%c0_19, %c0_20] : memref<16x128xbf16, #tpu.memory_space<vmem>>, vector<16x128xbf16>
      tpu.vector_store %arg8[%c0_19, %c0_20], %23 {strides = array<i32>} : memref<16x128xbf16, #tpu.memory_space<vmem>>, vector<16x128xbf16>,
    } else {
    }
    %c0 = arith.constant 0 : index
    %c0_1 = arith.constant 0 : index
    %c0_2 = arith.constant 0 : index
    %3 = vector.load %arg4[%c0, %c0_1, %c0_2] : memref<1x16x16xbf16, #tpu.memory_space<vmem>>, vector<1x16x16xbf16>
    %4 = vector.shape_cast %3 : vector<1x16x16xbf16> to vector<16x16xbf16>
    %c0_3 = arith.constant 0 : index
    %c0_4 = arith.constant 0 : index
    %5 = vector.load %arg8[%c0_3, %c0_4] : memref<16x128xbf16, #tpu.memory_space<vmem>>, vector<16x128xbf16>
    %cst = arith.constant dense<0.000000e+00> : vector<16x128xf32>
    %6 = tpu.matmul %4, %5, %cst {dimension_numbers = #tpu.dot_dimension_numbers<[1], [0], [0], [1], [0, 0, 1, 1], [], []>} : vector<16x16xbf16>, vector<16x128xbf16>, vector<16x128xf32> -> vector<16x128xf32>
    %c0_5 = arith.constant 0 : index
    %c0_6 = arith.constant 0 : index
    %7 = memref.load %arg6[%c0_5, %c0_6] : memref<1x1xf32, #tpu.memory_space<smem>>
    %c0_7 = arith.constant 0 : index
    %c0_8 = arith.constant 0 : index
    %8 = vector.load %arg5[%c0_7, %c0_8] : memref<1x128xf32, #tpu.memory_space<vmem>>, vector<1x128xf32>
    %9 = vector.broadcast %8 : vector<1x128xf32> to vector<16x128xf32>
    %10 = arith.addf %6, %9 : vector<16x128xf32>
    %cst_9 = arith.constant 0.000000e+00 : f32
    %11 = vector.broadcast %cst_9 : f32 to vector<16x128xf32>
    %12 = arith.cmpf ogt, %10, %11 : vector<16x128xf32>
    %13 = vector.broadcast %7 : f32 to vector<16x128xf32>
    %14 = arith.mulf %13, %10 : vector<16x128xf32>
    %15 = arith.select %12, %10, %14 : vector<16x128xi1>, vector<16x128xf32>
    %c0_10 = arith.constant 0 : index
    %c0_11 = arith.constant 0 : index
    %c0_12 = arith.constant 0 : index
    %16 = vector.load %arg7[%c0_10, %c0_11, %c0_12] : memref<1x16x128xf32, #tpu.memory_space<vmem>>, vector<1x16x128xf32>
    %17 = vector.shape_cast %16 : vector<1x16x128xf32> to vector<16x128xf32>
    %18 = vector.shape_cast %15 : vector<16x128xf32> to vector<1x16x128xf32>
    tpu.vector_store %arg7[%c0_10, %c0_11, %c0_12], %18 {strides = array<i32>} : memref<1x16x128xf32, #tpu.memory_space<vmem>>, vector<1x16x128xf32>,
    return
  }
  func.func @transform_0(%arg0: i32, %arg1: i32) -> (i32, i32, i32) {
    %c0_i32 = arith.constant 0 : i32
    %c0_i32_0 = arith.constant 0 : i32
    %c0_i32_1 = arith.constant 0 : i32
    return %arg0, %c0_i32, %c0_i32_0 : i32, i32, i32
  }
  func.func @transform_1(%arg0: i32, %arg1: i32) -> (i32, i32) {
    %c0_i32 = arith.constant 0 : i32
    %c0_i32_0 = arith.constant 0 : i32
    %c0_i32_1 = arith.constant 0 : i32
    return %c0_i32, %c0_i32_0 : i32, i32
  }
  func.func @transform_2(%arg0: i32, %arg1: i32) -> (i32, i32, i32) {
    %c0_i32 = arith.constant 0 : i32
    %c0_i32_0 = arith.constant 0 : i32
    return %arg0, %arg1, %c0_i32 : i32, i32, i32
  }
  func.func @transform_3(%arg0: i32, %arg1: i32) -> (i32, i32) {
    %c0_i32 = arith.constant 0 : i32
    %c0_i32_0 = arith.constant 0 : i32
    %c0_i32_1 = arith.constant 0 : i32
    return %c0_i32, %c0_i32_0 : i32, i32
  }
  func.func @transform_4(%arg0: i32, %arg1: i32) -> (i32, i32) {
    %c0_i32 = arith.constant 0 : i32
    %c0_i32_0 = arith.constant 0 : i32
    %c0_i32_1 = arith.constant 0 : i32
    return %c0_i32, %c0_i32_0 : i32, i32
  }
  func.func @transform_5(%arg0: i32, %arg1: i32) -> (i32, i32, i32) {
    %c0_i32 = arith.constant 0 : i32
    %c0_i32_0 = arith.constant 0 : i32
    return %arg0, %arg1, %c0_i32 : i32, i32, i32
  }
}

</mosaic_0001>

<llo_original>
// kernel: tpu_custom_call.1
$region0: #{tpu_custom_call.1}
  #allocation0 [shape = 'u32[]', space=smem, size = 0x4, offset = 0x4, fixed_abs, tag = 'smem constant byte address 0x4 - core index']
  #allocation1 [shape = 'u32[144,128]{1,0:T(1,128)}', space=vmem, size = 0x12000, scoped, tag = 'internal scratch']
  #allocation2 [shape = 'bf16[16,128]{1,0:T(8,128)(2,1)}', space=vmem, size = 0x1000, scoped, tag = 'scratch operand']
  #allocation3 [shape = 'f32[1,1]{1,0:T(1,128)S(6)}', space=smem, size = 0x200, scoped, tag = 'scoped memory for tpu_custom_call.1']
  %s0 = inlined_call_operand.hbm [shape: bf16[2,16,128], index: 0, kind: input, shape index: {}]
  %s1 = inlined_call_operand.hbm [shape: bf16[128,128], index: 1, kind: input, shape index: {}]
  %s2 = inlined_call_operand.hbm [shape: bf16[2,16,16], index: 2, kind: input, shape index: {}]
  %s3 = inlined_call_operand.vmem [shape: f32[1,128], index: 3, kind: input, shape index: {}]
  %s4 = inlined_call_operand.<no memory space> [shape: f32[1,1], index: 4, kind: input, shape index: {}]
  %s5 = inlined_call_operand.hbm [shape: f32[2,16,128], index: 5, kind: output, shape index: {}]
  %s6 = sld [smem:[#allocation0]]
  $region69: #{tpu_custom_call.1} parent=0
    _
  %s8 = ssub.s32 1, %s6
  %s9 = scalar_select 0, %s8, %s6
  %10 = sst [smem:[#allocation3]] %s4
  $region1: #{tpu_custom_call.1} parent=0
    #allocation4 [shape = 'u8[8192]{0}', space=vmem, size = 0x2000, scoped, tag = 'input window, operand 0']
    #allocation5 [shape = 's32[2]{0}', space=sflag, size = 0x8, scoped, tag = 'scoped memory for tpu_custom_call.1']
    #allocation6 [shape = 's32[2]{0}', space=sflag, size = 0x8, scoped, tag = 'scoped memory for tpu_custom_call.1']
    #allocation7 [shape = 'u8[32768]{0}', space=vmem, size = 0x8000, scoped, tag = 'input window, operand 1, single buffered']
    #allocation8 [shape = 's32[1]{0}', space=sflag, size = 0x4, scoped, tag = 'scoped memory for tpu_custom_call.1']
    #allocation9 [shape = 'u8[8192]{0}', space=vmem, size = 0x2000, scoped, tag = 'input window, operand 2']
    #allocation10 [shape = 'u8[16384]{0}', space=vmem, size = 0x4000, scoped, tag = 'output window, operand 0']
    %11 = vsyncpa [#allocation5], 0
    %s12 = scalar_lea.sflag [#allocation5], 1
    %13 = vsyncpa %s12, 0
    %14 = vsyncpa [#allocation8], 0
    %15 = vsyncpa [#allocation6], 0
    %s16 = scalar_lea.sflag [#allocation6], 1
    %17 = vsyncpa %s16, 0
    loop: start=0, step=1, limit=4
    $region2: #{tpu_custom_call.1} parent=1 // loop_pre_header
      _
    $region3: #{tpu_custom_call.1} parent=1 // loop_header
      %s19 = sphi 0, %s23
      %p20 = scmp.ge.s32.totalorder %s19, 4
      %s26 = sphi 0, %s38
      %s27 = sphi 0, %s34
      %s28 = sphi 0, %s26
      %s29 = sphi 0, %s27
      %s30 = sphi 0, %s28
      %s31 = sphi 0, %s29
      %s41 = sphi 0, %s43
      %s44 = sphi 0, %s41
      %s45 = sphi 0, %s44
      %s61 = sphi 0, %s45
      %s65 = sphi 0, %s65
      %s67 = sphi 0, %s65
      %s68 = sphi 0, %s67
      %s82 = sphi 0, %s68
      %s90 = sphi 0, %s92
      %s93 = sphi 0, %s90
      %s94 = sphi 0, %s93
      %s110 = sphi 0, %s94
      %s114 = sphi 0, %s114
      %s116 = sphi 0, %s114
      %s117 = sphi 0, %s116
      %s131 = sphi 0, %s117
      %s135 = sphi 0, %s135
      %s137 = sphi 0, %s135
      %s138 = sphi 0, %s137
      %s152 = sphi 0, %s138
      %s160 = sphi 0, %s162
      %s163 = sphi 0, %s160
      %s164 = sphi 0, %s163
      %s180 = sphi 0, %s164
    $region4: #{tpu_custom_call.1} parent=1 // loop_header_branch
      %22 = sbr.rel (%p20) target = $region8
    $region5: #{tpu_custom_call.1} parent=1 // loop_body
      %s24 = ssub.s32 %s19, 1
      %s25 = ssub.s32 %s19, 2
      %s32 = sadd.s32 1, %s27
      %p33 = scmp.ge.s32.totalorder %s32, 1
      %s34 = scalar_select %p33, 0, %s32
      %s35 = sadd.s32 1, %s26
      %s36 = scalar_select %p33, %s35, %s26
      %p37 = scmp.ge.s32.totalorder %s36, 2
      %s38 = scalar_select %p37, 0, %s36
      %s39 = ssub.s32 %s26, %s38
      %p40 = scmp.eq.s32.totalorder %s39, 0
      %s42 = sadd.s32 %s41, 1
      %s43 = scalar_select %p40, %s41, %s42
      %p46 = pneg %p40
      %p47 = scmp.eq.s32.totalorder %s19, 1
      %p48 = por %p46, %p47
      %p49 = scmp.ne.s32.totalorder %s41, %s44
      %p50 = scmp.eq.s32.totalorder %s19, 0
      %p51 = por %p49, %p50
      %p52 = scmp.ne.s32.totalorder %s41, %s44
      %p53 = scmp.eq.s32.totalorder %s24, 1
      %p54 = por %p52, %p53
      %p55 = scmp.ne.s32.totalorder %s44, %s45
      %p56 = scmp.eq.s32.totalorder %s24, 0
      %p57 = por %p55, %p56
      %p58 = scmp.ne.s32.totalorder %s44, %s45
      %p59 = scmp.eq.s32.totalorder %s25, 1
      %p60 = por %p58, %p59
      %p62 = scmp.ne.s32.totalorder %s45, %s61
      %p63 = scmp.eq.s32.totalorder %s25, 0
      %p64 = por %p62, %p63
      %s66 = sadd.s32 %s65, 1
      %p69 = scmp.eq.s32.totalorder %s19, 1
      %p70 = scmp.ne.s32.totalorder %s65, %s67
      %p71 = scmp.eq.s32.totalorder %s19, 0
      %p72 = por %p70, %p71
      %p73 = scmp.ne.s32.totalorder %s65, %s67
      %p74 = scmp.eq.s32.totalorder %s24, 1
      %p75 = por %p73, %p74
      %p76 = scmp.ne.s32.totalorder %s67, %s68
      %p77 = scmp.eq.s32.totalorder %s24, 0
      %p78 = por %p76, %p77
      %p79 = scmp.ne.s32.totalorder %s67, %s68
      %p80 = scmp.eq.s32.totalorder %s25, 1
      %p81 = por %p79, %p80
      %p83 = scmp.ne.s32.totalorder %s68, %s82
      %p84 = scmp.eq.s32.totalorder %s25, 0
      %p85 = por %p83, %p84
      %s86 = ssub.s32 %s26, %s38
      %s87 = ssub.s32 %s27, %s34
      %s88 = sor.u32 %s86, %s87
      %p89 = scmp.eq.s32.totalorder %s88, 0
      %s91 = sadd.s32 %s90, 1
      %s92 = scalar_select %p89, %s90, %s91
      %p95 = pneg %p89
      %p96 = scmp.eq.s32.totalorder %s19, 1
      %p97 = por %p95, %p96
      %p98 = scmp.ne.s32.totalorder %s90, %s93
      %p99 = scmp.eq.s32.totalorder %s19, 0
      %p100 = por %p98, %p99
      %p101 = scmp.ne.s32.totalorder %s90, %s93
      %p102 = scmp.eq.s32.totalorder %s24, 1
      %p103 = por %p101, %p102
      %p104 = scmp.ne.s32.totalorder %s93, %s94
      %p105 = scmp.eq.s32.totalorder %s24, 0
      %p106 = por %p104, %p105
      %p107 = scmp.ne.s32.totalorder %s93, %s94
      %p108 = scmp.eq.s32.totalorder %s25, 1
      %p109 = por %p107, %p108
      %p111 = scmp.ne.s32.totalorder %s94, %s110
      %p112 = scmp.eq.s32.totalorder %s25, 0
      %p113 = por %p111, %p112
      %s115 = sadd.s32 %s114, 1
      %p118 = scmp.eq.s32.totalorder %s19, 1
      %p119 = scmp.ne.s32.totalorder %s114, %s116
      %p120 = scmp.eq.s32.totalorder %s19, 0
      %p121 = por %p119, %p120
      %p122 = scmp.ne.s32.totalorder %s114, %s116
      %p123 = scmp.eq.s32.totalorder %s24, 1
      %p124 = por %p122, %p123
      %p125 = scmp.ne.s32.totalorder %s116, %s117
      %p126 = scmp.eq.s32.totalorder %s24, 0
      %p127 = por %p125, %p126
      %p128 = scmp.ne.s32.totalorder %s116, %s117
      %p129 = scmp.eq.s32.totalorder %s25, 1
      %p130 = por %p128, %p129
      %p132 = scmp.ne.s32.totalorder %s117, %s131
      %p133 = scmp.eq.s32.totalorder %s25, 0
      %p134 = por %p132, %p133
      %s136 = sadd.s32 %s135, 1
      %p139 = scmp.eq.s32.totalorder %s19, 1
      %p140 = scmp.ne.s32.totalorder %s135, %s137
      %p141 = scmp.eq.s32.totalorder %s19, 0
      %p142 = por %p140, %p141
      %p143 = scmp.ne.s32.totalorder %s135, %s137
      %p144 = scmp.eq.s32.totalorder %s24, 1
      %p145 = por %p143, %p144
      %p146 = scmp.ne.s32.totalorder %s137, %s138
      %p147 = scmp.eq.s32.totalorder %s24, 0
      %p148 = por %p146, %p147
      %p149 = scmp.ne.s32.totalorder %s137, %s138
      %p150 = scmp.eq.s32.totalorder %s25, 1
      %p151 = por %p149, %p150
      %p153 = scmp.ne.s32.totalorder %s138, %s152
      %p154 = scmp.eq.s32.totalorder %s25, 0
      %p155 = por %p153, %p154
      %s156 = ssub.s32 %s26, %s38
      %s157 = ssub.s32 %s27, %s34
      %s158 = sor.u32 %s156, %s157
      %p159 = scmp.eq.s32.totalorder %s158, 0
      %s161 = sadd.s32 %s160, 1
      %s162 = scalar_select %p159, %s160, %s161
      %p165 = pneg %p159
      %p166 = scmp.eq.s32.totalorder %s19, 1
      %p167 = por %p165, %p166
      %p168 = scmp.ne.s32.totalorder %s160, %s163
      %p169 = scmp.eq.s32.totalorder %s19, 0
      %p170 = por %p168, %p169
      %p171 = scmp.ne.s32.totalorder %s160, %s163
      %p172 = scmp.eq.s32.totalorder %s24, 1
      %p173 = por %p171, %p172
      %p174 = scmp.ne.s32.totalorder %s163, %s164
      %p175 = scmp.eq.s32.totalorder %s24, 0
      %p176 = por %p174, %p175
      %p177 = scmp.ne.s32.totalorder %s163, %s164
      %p178 = scmp.eq.s32.totalorder %s25, 1
      %p179 = por %p177, %p178
      %p181 = scmp.ne.s32.totalorder %s164, %s180
      %p182 = scmp.eq.s32.totalorder %s25, 0
      %p183 = por %p181, %p182
      %p184 = scmp.le.s32.totalorder 1, %s19
      %p185 = scmp.lt.s32.totalorder %s19, 3
      %p186 = pnand %p184, %p185
      %p187 = pneg %p186
      // Predicated region
      $region9: #{tpu_custom_call.1} parent=5 // pred_check
        _
      $region10: #{tpu_custom_call.1} parent=5 // pred_check_branch
        %189 = sbr.rel (%p186) target = $region12
      $region11: #{tpu_custom_call.1} parent=5 // pred_region
        %s190 = ssub.s32 %s19, 1
        // Predicated region
        $region13: #{tpu_custom_call.1} parent=11 // pred_check
          %p191 = pneg %p78
        $region14: #{tpu_custom_call.1} parent=11 // pred_check_branch
          %193 = sbr.rel (%p191) target = $region16
        $region15: #{tpu_custom_call.1} parent=11 // pred_region
          %s195 = ssub.s32 1024, 1024
          %196 = vsyncadd [#allocation8], %s195
          %s197 = sshll.u32 [#allocation7], 4
          %s198 = int_to_ptr.vmem [resolvable:$true] %s197
          %203 = dma.hbm_to_vmem [thread:$0]  %s1, 1024, %s198, [#allocation8], 64, 64, 4
        $region16: #{tpu_custom_call.1} parent=11 // pred_fallthru
          _
        // Predicated region
        $region17: #{tpu_custom_call.1} parent=11 // pred_check
          %p204 = pneg %p127
        $region18: #{tpu_custom_call.1} parent=11 // pred_check_branch
          %206 = sbr.rel (%p204) target = $region20
        $region19: #{tpu_custom_call.1} parent=11 // pred_region
          _
        $region20: #{tpu_custom_call.1} parent=11 // pred_fallthru
          _
        // Predicated region
        $region21: #{tpu_custom_call.1} parent=11 // pred_check
          %p207 = pneg %p148
        $region22: #{tpu_custom_call.1} parent=11 // pred_check_branch
          %209 = sbr.rel (%p207) target = $region24
        $region23: #{tpu_custom_call.1} parent=11 // pred_region
          _
        $region24: #{tpu_custom_call.1} parent=11 // pred_fallthru
          _
      $region12: #{tpu_custom_call.1} parent=5 // pred_fallthru
        _
      %p210 = scmp.lt.s32.totalorder %s19, 2
      // Predicated region
      $region25: #{tpu_custom_call.1} parent=5 // pred_check
        %p211 = pneg %p210
      $region26: #{tpu_custom_call.1} parent=5 // pred_check_branch
        %213 = sbr.rel (%p211) target = $region28
      $region27: #{tpu_custom_call.1} parent=5 // pred_region
        // Predicated region
        $region29: #{tpu_custom_call.1} parent=27 // pred_check
          %p214 = pneg %p51
        $region30: #{tpu_custom_call.1} parent=27 // pred_check_branch
          %216 = sbr.rel (%p214) target = $region32
        $region31: #{tpu_custom_call.1} parent=27 // pred_region
          %s217 = sand.u32 %s19, 1
          %s218 = scalar_lea.sflag [#allocation5], %s217
          %s219 = sand.u32 %s41, 1
          %s220 = smul.addr %s219, 8
          %s221 = scalar_lea.vmem [#allocation4], %s220
          %s223 = ssub.s32 128, 128
          %224 = vsyncadd %s218, %s223
          %s225 = smul.addr %s26, 2
          %s226 = smul.addr %s225, 64
          %s227 = scalar_lea.hbm %s0, %s226
          %s228 = sshll.u32 %s221, 4
          %s229 = int_to_ptr.vmem [resolvable:$true] %s228
          %234 = dma.hbm_to_vmem [thread:$0]  %s227, 128, %s229, %s218, 64, 64, 4
        $region32: #{tpu_custom_call.1} parent=27 // pred_fallthru
          _
        // Predicated region
        $region33: #{tpu_custom_call.1} parent=27 // pred_check
          %p235 = pneg %p100
        $region34: #{tpu_custom_call.1} parent=27 // pred_check_branch
          %237 = sbr.rel (%p235) target = $region36
        $region35: #{tpu_custom_call.1} parent=27 // pred_region
          %s238 = sand.u32 %s19, 1
          %s239 = scalar_lea.sflag [#allocation5], %s238
          %s240 = sand.u32 %s90, 1
          %s241 = smul.addr %s240, 8
          %s242 = scalar_lea.vmem [#allocation9], %s241
          %s243 = smul.u32 2, %s27
          %s245 = ssub.s32 128, 128
          %246 = vsyncadd %s239, %s245
          %s247 = smul.addr %s26, 2
          %s248 = sadd.s32 %s243, %s247
          %s249 = smul.addr %s248, 64
          %s250 = scalar_lea.hbm %s2, %s249
          %s251 = sshll.u32 %s242, 4
          %s252 = int_to_ptr.vmem [resolvable:$true] %s251
          %257 = dma.hbm_to_vmem [thread:$0]  %s250, 128, %s252, %s239, 64, 64, 4
        $region36: #{tpu_custom_call.1} parent=27 // pred_fallthru
          _
      $region28: #{tpu_custom_call.1} parent=5 // pred_fallthru
        _
      %p258 = scmp.le.s32.totalorder 1, %s19
      %p259 = scmp.lt.s32.totalorder %s19, 3
      %p260 = pnand %p258, %p259
      %p261 = pneg %p260
      // Predicated region
      $region37: #{tpu_custom_call.1} parent=5 // pred_check
        _
      $region38: #{tpu_custom_call.1} parent=5 // pred_check_branch
        %263 = sbr.rel (%p260) target = $region40
      $region39: #{tpu_custom_call.1} parent=5 // pred_region
        %s264 = ssub.s32 %s19, 1
        %s265 = sand.u32 %s24, 1
        %s266 = scalar_lea.sflag [#allocation5], %s265
        %s267 = sand.u32 %s44, 1
        %s268 = smul.addr %s267, 8
        %s269 = scalar_lea.vmem [#allocation4], %s268
        // Predicated region
        $region41: #{tpu_custom_call.1} parent=39 // pred_check
          %p270 = pneg %p57
        $region42: #{tpu_custom_call.1} parent=39 // pred_check_branch
          %272 = sbr.rel (%p270) target = $region44
        $region43: #{tpu_custom_call.1} parent=39 // pred_region
          %273 = dma.done %s266, 128
        $region44: #{tpu_custom_call.1} parent=39 // pred_fallthru
          _
        // Predicated region
        $region45: #{tpu_custom_call.1} parent=39 // pred_check
          %p274 = pneg %p78
        $region46: #{tpu_custom_call.1} parent=39 // pred_check_branch
          %276 = sbr.rel (%p274) target = $region48
        $region47: #{tpu_custom_call.1} parent=39 // pred_region
          %277 = dma.done [#allocation8], 1024
        $region48: #{tpu_custom_call.1} parent=39 // pred_fallthru
          _
        %s278 = sand.u32 %s24, 1
        %s279 = scalar_lea.sflag [#allocation5], %s278
        %s280 = sand.u32 %s93, 1
        %s281 = smul.addr %s280, 8
        %s282 = scalar_lea.vmem [#allocation9], %s281
        // Predicated region
        $region49: #{tpu_custom_call.1} parent=39 // pred_check
          %p283 = pneg %p106
        $region50: #{tpu_custom_call.1} parent=39 // pred_check_branch
          %285 = sbr.rel (%p283) target = $region52
        $region51: #{tpu_custom_call.1} parent=39 // pred_region
          %286 = dma.done %s279, 128
        $region52: #{tpu_custom_call.1} parent=39 // pred_fallthru
          _
        %s287 = sand.u32 %s24, 1
        %s288 = scalar_lea.sflag [#allocation5], %s287
        %s289 = sand.u32 %s44, 1
        %s290 = smul.addr %s289, 8
        %s291 = scalar_lea.vmem [#allocation4], %s290
        %p292 = pneg %p57
        %p293 = pneg %p54
        %p294 = pneg %p78
        %p295 = pneg %p75
        %s296 = sand.u32 %s24, 1
        %s297 = scalar_lea.sflag [#allocation5], %s296
        %s298 = sand.u32 %s93, 1
        %s299 = smul.addr %s298, 8
        %s300 = scalar_lea.vmem [#allocation9], %s299
        %p301 = pneg %p106
        %p302 = pneg %p103
        %p303 = pneg %p127
        %p304 = pneg %p124
        %p305 = pneg %p148
        %p306 = pneg %p145
        %p307 = pneg %p176
        %p308 = pneg %p173
        %s309 = sand.u32 %s163, 1
        %s310 = scalar_lea.sflag [#allocation6], %s309
        %s311 = sand.u32 %s163, 1
        %s312 = smul.addr %s311, 16
        %s313 = scalar_lea.vmem [#allocation10], %s312
        %s314 = smul.u32 2, %s29
        %s315 = smul.u32 2, %s29
        %p317 = scmp.eq.s32.totalorder %s29, 0
        // Predicated region
        $region53: #{tpu_custom_call.1} parent=39 // pred_check
          %p318 = pneg %p317
        $region54: #{tpu_custom_call.1} parent=39 // pred_check_branch
          %320 = sbr.rel (%p318) target = $region56
        $region55: #{tpu_custom_call.1} parent=39 // pred_region
          %v321 = vld [vmem:[%s269] sm:$0xf]
          %v322 = vld [vmem:[%s269 + $0x4] sm:$0xf]
          %v323 = vld [vmem:[#allocation7] sm:$0xf]
          %v324 = vld [vmem:[#allocation7 + $0x4] sm:$0xf]
          %v325 = vld [vmem:[#allocation7 + $0x8] sm:$0xf]
          %v326 = vld [vmem:[#allocation7 + $0xc] sm:$0xf]
          %v327 = vld [vmem:[#allocation7 + $0x10] sm:$0xf]
          %v328 = vld [vmem:[#allocation7 + $0x14] sm:$0xf]
          %v329 = vld [vmem:[#allocation7 + $0x18] sm:$0xf]
          %v330 = vld [vmem:[#allocation7 + $0x1c] sm:$0xf]
          %v331 = vld [vmem:[#allocation7 + $0x20] sm:$0xf]
          %v332 = vld [vmem:[#allocation7 + $0x24] sm:$0xf]
          %v333 = vld [vmem:[#allocation7 + $0x28] sm:$0xf]
          %v334 = vld [vmem:[#allocation7 + $0x2c] sm:$0xf]
          %v335 = vld [vmem:[#allocation7 + $0x30] sm:$0xf]
          %v336 = vld [vmem:[#allocation7 + $0x34] sm:$0xf]
          %v337 = vld [vmem:[#allocation7 + $0x38] sm:$0xf]
          %v338 = vld [vmem:[#allocation7 + $0x3c] sm:$0xf]
          %v341 = vunpack.c.l.b16 %v321
          %v342 = vunpack.c.l.b16 %v322
          %v343 = vpack.c.b16 %v342, %v341
          %v361 = vunpack.c.l.b16 %v323
          %v362 = vunpack.c.l.b16 %v324
          %v363 = vunpack.c.l.b16 %v325
          %v364 = vunpack.c.l.b16 %v326
          %v365 = vunpack.c.l.b16 %v327
          %v366 = vunpack.c.l.b16 %v328
          %v367 = vunpack.c.l.b16 %v329
          %v368 = vunpack.c.l.b16 %v330
          %v369 = vunpack.c.l.b16 %v331
          %v370 = vunpack.c.l.b16 %v332
          %v371 = vunpack.c.l.b16 %v333
          %v372 = vunpack.c.l.b16 %v334
          %v373 = vunpack.c.l.b16 %v335
          %v374 = vunpack.c.l.b16 %v336
          %v375 = vunpack.c.l.b16 %v337
          %v376 = vunpack.c.l.b16 %v338
          %v377 = vpack.c.b16 %v362, %v361
          %v378 = vpack.c.b16 %v364, %v363
          %v379 = vpack.c.b16 %v366, %v365
          %v380 = vpack.c.b16 %v368, %v367
          %v381 = vpack.c.b16 %v370, %v369
          %v382 = vpack.c.b16 %v372, %v371
          %v383 = vpack.c.b16 %v374, %v373
          %v384 = vpack.c.b16 %v376, %v375
          %393 = vmatprep.subr.bf16.mxu0 0
          %394 = vmatpush1.bf16.msra.mxu0 %v384
          %395 = vmatprep.subr.bf16.mxu0 0
          %396 = vmatpush1.bf16.msra.mxu0 %v383
          %397 = vmatprep.subr.bf16.mxu0 0
          %398 = vmatpush1.bf16.msra.mxu0 %v382
          %399 = vmatprep.subr.bf16.mxu0 0
          %400 = vmatpush1.bf16.msra.mxu0 %v381
          %401 = vmatprep.subr.bf16.mxu0 0
          %402 = vmatpush1.bf16.msra.mxu0 %v380
          %403 = vmatprep.subr.bf16.mxu0 0
          %404 = vmatpush1.bf16.msra.mxu0 %v379
          %405 = vmatprep.subr.bf16.mxu0 0
          %406 = vmatpush1.bf16.msra.mxu0 %v378
          %407 = vmatprep.subr.bf16.mxu0 0
          %408 = vmatpush1.bf16.msra.mxu0 %v377
          %409 = vmatprep.subr.bf16.mxu0 0
          %410 = vmatpush2.bf16.msra.mxu0 0
          %411 = vmatprep.subr.bf16.mxu0 0
          %412 = vmatpush2.bf16.msra.mxu0 0
          %413 = vmatprep.subr.bf16.mxu0 0
          %414 = vmatpush2.bf16.msra.mxu0 0
          %415 = vmatprep.subr.bf16.mxu0 0
          %416 = vmatpush2.bf16.msra.mxu0 0
          %417 = vmatprep.subr.bf16.mxu0 0
          %418 = vmatpush2.bf16.msra.mxu0 0
          %419 = vmatprep.subr.bf16.mxu0 0
          %420 = vmatpush2.bf16.msra.mxu0 0
          %421 = vmatprep.subr.bf16.mxu0 0
          %422 = vmatpush2.bf16.msra.mxu0 0
          %423 = vmatprep.subr.bf16.mxu0 0
          %424 = vmatpush2.bf16.msra.mxu0 0
          %425 = vmatprep.mubr.bf16.mxu0 0
          %426 = vmatmul.mubr.bf16.gmra.mxu0 %v343
          %v427 = vpop.f32.mrf.mxu0
          %v428 = vadd.f32 0.0, %v427
          %v429 = vpop.f32.mrf.mxu0
          %v430 = vpop.f32.mrf.mxu0
          %v431 = vadd.f32 0.0, %v430
          %v432 = vpop.f32.mrf.mxu0
          %433 = vdwg.mxu0
          %v434 = vpack.c.bf16 %v431, %v428
          %v436 = vunpack.c.l.b16 %v434
          %v437 = vunpack.c.h.b16 %v434
          %v438 = vpack.c.b16 %v436, %v436
          %v439 = vpack.c.b16 %v437, %v437
          %442 = vst [vmem:[#allocation2] sm:$0xf] %v438
          %443 = vst [vmem:[#allocation2 + $0x4] sm:$0xf] %v439
        $region56: #{tpu_custom_call.1} parent=39 // pred_fallthru
          _
        %v444 = vld [vmem:[%s282] sm:$0xf]
        %v445 = vld [vmem:[%s282 + $0x4] sm:$0xf]
        %v446 = vld [vmem:[#allocation2] sm:$0xf]
        %v447 = vld [vmem:[#allocation2 + $0x4] sm:$0xf]
        %s448 = sld [smem:[#allocation3]]
        %v449 = vld [vmem:[%s3] sm:$0x1]
        %v451 = vlaneseq
        %v452 = vshrl.u32 %v451, 7
        %v453 = vsub.s32 0, %v452
        %v454 = vrot.slane %v449, %v453
        %v458 = vunpack.c.l.b16 %v444
        %v459 = vunpack.c.l.b16 %v445
        %v460 = vpack.c.b16 %v459, %v458
        %v463 = vunpack.c.l.b16 %v446
        %v464 = vunpack.c.l.b16 %v447
        %v465 = vpack.c.b16 %v464, %v463
        %vm467 = vcmask 130048
        %v469 = vsel %vm467, %v460, 0
        %471 = vmatprep.subr.bf16.mxu0 0
        %472 = vmatpush1.bf16.msra.mxu0 0
        %473 = vmatprep.subr.bf16.mxu0 0
        %474 = vmatpush1.bf16.msra.mxu0 0
        %475 = vmatprep.subr.bf16.mxu0 0
        %476 = vmatpush1.bf16.msra.mxu0 0
        %477 = vmatprep.subr.bf16.mxu0 0
        %478 = vmatpush1.bf16.msra.mxu0 0
        %479 = vmatprep.subr.bf16.mxu0 0
        %480 = vmatpush1.bf16.msra.mxu0 0
        %481 = vmatprep.subr.bf16.mxu0 0
        %482 = vmatpush1.bf16.msra.mxu0 0
        %483 = vmatprep.subr.bf16.mxu0 0
        %484 = vmatpush1.bf16.msra.mxu0 0
        %485 = vmatprep.subr.bf16.mxu0 0
        %486 = vmatpush1.bf16.msra.mxu0 %v465
        %487 = vmatprep.subr.bf16.mxu0 0
        %488 = vmatpush2.bf16.msra.mxu0 0
        %489 = vmatprep.subr.bf16.mxu0 0
        %490 = vmatpush2.bf16.msra.mxu0 0
        %491 = vmatprep.subr.bf16.mxu0 0
        %492 = vmatpush2.bf16.msra.mxu0 0
        %493 = vmatprep.subr.bf16.mxu0 0
        %494 = vmatpush2.bf16.msra.mxu0 0
        %495 = vmatprep.subr.bf16.mxu0 0
        %496 = vmatpush2.bf16.msra.mxu0 0
        %497 = vmatprep.subr.bf16.mxu0 0
        %498 = vmatpush2.bf16.msra.mxu0 0
        %499 = vmatprep.subr.bf16.mxu0 0
        %500 = vmatpush2.bf16.msra.mxu0 0
        %501 = vmatprep.subr.bf16.mxu0 0
        %502 = vmatpush2.bf16.msra.mxu0 0
        %503 = vmatprep.mubr.bf16.mxu0 0
        %504 = vmatmul.mubr.bf16.gmra.mxu0 %v469
        %v505 = vpop.f32.mrf.mxu0
        %v506 = vadd.f32 %v454, %v505
        %v507 = vpop.f32.mrf.mxu0
        %v508 = vpop.f32.mrf.mxu0
        %v509 = vadd.f32 %v454, %v508
        %v510 = vpop.f32.mrf.mxu0
        %511 = vdwg.mxu0
        %vm512 = vcmp.gt.f32.partialorder %v506, 0.0
        %vm513 = vcmp.gt.f32.partialorder %v509, 0.0
        %v514 = vstv %s448
        %v515 = vmul.f32 %v514, %v506
        %v516 = vmul.f32 %v514, %v509
        %v517 = vsel %vm512, %v506, %v515
        %v518 = vsel %vm513, %v509, %v516
        %519 = vst [vmem:[%s313] sm:$0xff] %v517
        %520 = vst [vmem:[%s313 + $0x8] sm:$0xff] %v518
        %s521 = sand.u32 %s163, 1
        %s522 = scalar_lea.sflag [#allocation6], %s521
        %s523 = sand.u32 %s163, 1
        %s524 = smul.addr %s523, 16
        %s525 = scalar_lea.vmem [#allocation10], %s524
        // Predicated region
        $region57: #{tpu_custom_call.1} parent=39 // pred_check
          %p526 = pneg %p173
        $region58: #{tpu_custom_call.1} parent=39 // pred_check_branch
          %528 = sbr.rel (%p526) target = $region60
        $region59: #{tpu_custom_call.1} parent=39 // pred_region
          %s529 = smul.u32 2, %s29
          %s531 = ssub.s32 256, 256
          %532 = vsyncadd %s522, %s531
          %s533 = smul.addr %s28, 2
          %s534 = sadd.s32 %s529, %s533
          %s535 = smul.addr %s534, 128
          %s536 = scalar_lea.hbm %s5, %s535
          %s537 = sshll.u32 %s525, 4
          %s538 = int_to_ptr.vmem [resolvable:$true] %s537
          %543 = dma.vmem_to_hbm [thread:$0]  %s538, 256, %s536, %s522, 128, 128, 8
        $region60: #{tpu_custom_call.1} parent=39 // pred_fallthru
          _
      $region40: #{tpu_custom_call.1} parent=5 // pred_fallthru
        _
      %p544 = scmp.le.s32.totalorder 2, %s19
      // Predicated region
      $region61: #{tpu_custom_call.1} parent=5 // pred_check
        %p545 = pneg %p544
      $region62: #{tpu_custom_call.1} parent=5 // pred_check_branch
        %547 = sbr.rel (%p545) target = $region64
      $region63: #{tpu_custom_call.1} parent=5 // pred_region
        %s548 = ssub.s32 %s19, 2
        // Predicated region
        $region65: #{tpu_custom_call.1} parent=63 // pred_check
          %p549 = pneg %p179
        $region66: #{tpu_custom_call.1} parent=63 // pred_check_branch
          %551 = sbr.rel (%p549) target = $region68
        $region67: #{tpu_custom_call.1} parent=63 // pred_region
          %s552 = sand.u32 %s164, 1
          %s553 = scalar_lea.sflag [#allocation6], %s552
          %s554 = sand.u32 %s164, 1
          %s555 = smul.addr %s554, 16
          %s556 = scalar_lea.vmem [#allocation10], %s555
          %557 = dma.done %s553, 256
        $region68: #{tpu_custom_call.1} parent=63 // pred_fallthru
          _
      $region64: #{tpu_custom_call.1} parent=5 // pred_fallthru
        _
    $region6: #{tpu_custom_call.1} parent=1 // loop_footer
      %s23 = sadd.s32 1, %s19
    $region7: #{tpu_custom_call.1} parent=1 // loop_footer_branch
      %18 = sbr.rel target = $region3
    $region8: #{tpu_custom_call.1} parent=1 // loop_exit
      _
    %558 = vsyncpa [#allocation5], 1
    %s559 = scalar_lea.sflag [#allocation5], 1
    %560 = vsyncpa %s559, 1
    %561 = vsyncpa [#allocation8], 1
    %562 = vsyncpa [#allocation6], 1
    %s563 = scalar_lea.sflag [#allocation6], 1
    %564 = vsyncpa %s563, 1

</llo_original>
